<compile_context>
chip_gen: v7x
topology: tpu7x:2x2x1
jax: 0.10.0
libtpu: 0.0.40
codegen_flags: <defaults>
</compile_context>

<pallas_src>
import functools

import jax
import jax.numpy as jnp
from jax.experimental import pallas as pl
from jax.experimental.pallas import tpu as pltpu


def _round_up(x, m):
    return ((x + m - 1) // m) * m


def _round_down(x, m):
    return (x // m) * m


def _bce_kernel(pred_ref, gt_ref, out_ref, acc_ref, *,
                n_rows, n_cols, block_rows, block_cols,
                mask_rows, mask_cols):
    j = pl.program_id(0)   # column partition (parallel axis)
    i = pl.program_id(1)   # row block (reduction axis, innermost)

    @pl.when(i == 0)
    def _():
        acc_ref[...] = jnp.zeros_like(acc_ref)

    x = pred_ref[...].astype(jnp.float32)
    y = gt_ref[...].astype(jnp.float32)
    # Numerically stable BCE with logits (matches torch.nn.BCEWithLogitsLoss):
    #   max(x, 0) - x*y + log(1 + exp(-|x|))
    per_elem = jnp.maximum(x, 0.0) - x * y + jnp.log1p(jnp.exp(-jnp.abs(x)))

    if mask_rows or mask_cols:
        valid = None
        if mask_rows:
            row_ids = jax.lax.broadcasted_iota(jnp.int32, per_elem.shape, 0)
            valid = (row_ids + i * block_rows) < n_rows
        if mask_cols:
            col_ids = jax.lax.broadcasted_iota(jnp.int32, per_elem.shape, 1)
            cvalid = (col_ids + j * block_cols) < n_cols
            valid = cvalid if valid is None else jnp.logical_and(valid, cvalid)
        # Keep as a select (where), NOT a multiply: edge blocks can hold
        # garbage producing NaN/Inf in per_elem; select blocks propagation.
        per_elem = jnp.where(valid, per_elem, 0.0)

    acc_ref[...] += per_elem

    @pl.when(i == pl.num_programs(1) - 1)
    def _():
        # One cross-lane reduce per column partition. Only element [0, 0] of
        # the (8, 128) output tile is consumed by the wrapper (do NOT sum the
        # whole tile — the partial is broadcast into all 1024 slots).
        partial = jnp.sum(acc_ref[...])
        out_ref[...] = jnp.broadcast_to(partial, out_ref.shape).astype(jnp.float32)


def _choose_blocks(n, hw, target_block_bytes):
    """Pick (bn, bhw): ~target bytes per input block, 128-aligned lanes, and
    >=2 column partitions whenever hw spans more than one 128-lane block so
    both v7x TensorCores get work."""
    elem_bytes = 4  # f32 compute footprint per element
    target_elems = max(1, target_block_bytes // elem_bytes)

    hw_pad = _round_up(hw, 128)
    if hw_pad > 128:
        # Cap the column block at ~half the columns -> >=2 parallel partitions.
        max_bhw = _round_up(pl.cdiv(hw, 2), 128)
    else:
        max_bhw = hw_pad

    # Pass 1: modest lane width, fill rows toward the byte target.
    bhw = min(max_bhw, 4096)
    if n <= 8:
        bn = n
    else:
        bn = min(_round_down(n, 8), max(8, _round_down(target_elems // bhw, 8)))

    # Pass 2: rows exhausted but block still small -> widen lanes.
    if bn * bhw < target_elems and bhw < max_bhw:
        want = max(128, _round_down(target_elems // max(bn, 1), 128))
        bhw = min(max_bhw, max(bhw, want))

    return bn, bhw


def bce_with_logits_loss(pred, gt, *, target_block_bytes=2 << 20):
    """pred: (N, C, H, W); gt: (N, H, W). Returns the scalar mean BCE-with-
    logits loss of pred[:, 0, :, :] vs gt. Accepts f32 or bf16 inputs
    (kernel upcasts and accumulates in f32)."""
    n, c, h, w = pred.shape
    assert gt.shape == (n, h, w)
    hw = h * w

    # Free, contiguous reshapes (no channel-slice materialization):
    # channel 0 of sample i occupies pred2[i, 0:hw].
    pred2 = pred.reshape(n, c * hw)
    gt2 = gt.reshape(n, hw)

    bn, bhw = _choose_blocks(n, hw, target_block_bytes)

    # If the lane block is wider than an input (tiny hw), pad columns once in
    # the wrapper; padded columns are masked out inside the kernel.
    if gt2.shape[1] < bhw:
        gt2 = jnp.pad(gt2, ((0, 0), (0, bhw - gt2.shape[1])))
    if pred2.shape[1] < bhw:
        pred2 = jnp.pad(pred2, ((0, 0), (0, bhw - pred2.shape[1])))

    grid_rows = pl.cdiv(n, bn)     # reduction axis (innermost)
    grid_cols = pl.cdiv(hw, bhw)   # parallel partition axis

    mask_rows = (grid_rows * bn) != n
    mask_cols = (grid_cols * bhw) != hw

    kernel = functools.partial(
        _bce_kernel,
        n_rows=n, n_cols=hw,
        block_rows=bn, block_cols=bhw,
        mask_rows=mask_rows, mask_cols=mask_cols,
    )

    partials = pl.pallas_call(
        kernel,
        out_shape=jax.ShapeDtypeStruct((grid_cols, 8, 128), jnp.float32),
        grid_spec=pltpu.PrefetchScalarGridSpec(
            num_scalar_prefetch=0,
            grid=(grid_cols, grid_rows),
            in_specs=[
                pl.BlockSpec((bn, bhw), lambda j, i: (i, j)),  # pred2 (ch-0 cols)
                pl.BlockSpec((bn, bhw), lambda j, i: (i, j)),  # gt2
            ],
            out_specs=pl.BlockSpec((1, 8, 128), lambda j, i: (j, 0, 0)),
            scratch_shapes=[pltpu.VMEM((bn, bhw), jnp.float32)],
        ),
        compiler_params=pltpu.CompilerParams(
            dimension_semantics=("parallel", "arbitrary"),
            vmem_limit_bytes=32 << 20,
        ),
    )(pred2, gt2)

    # One partial sum per column partition; finish the mean in the wrapper.
    return jnp.sum(partials[:, 0, 0]) / jnp.float32(n * hw)


if __name__ == "__main__":
    key = jax.random.PRNGKey(0)
    k_pred, k_gt = jax.random.split(key)

    N, C, H, W = 2, 4, 16, 16
    pred = jax.random.normal(k_pred, (N, C, H, W), dtype=jnp.float32)
    gt = jax.random.uniform(k_gt, (N, H, W), dtype=jnp.float32)  # targets in [0, 1]

    loss = jax.block_until_ready(bce_with_logits_loss(pred, gt))

    # Reference check (pure JAX, same stable formulation as torch)
    x = pred[:, 0, :, :].astype(jnp.float32)
    y = gt.astype(jnp.float32)
    ref = jnp.mean(jnp.maximum(x, 0.0) - x * y + jnp.log1p(jnp.exp(-jnp.abs(x))))
    assert jnp.allclose(loss, ref, atol=1e-5, rtol=1e-5), (loss, ref)

    # bf16 input path (halves HBM bytes; kernel upcasts, accumulates in f32).
    loss_bf16 = jax.block_until_ready(
        bce_with_logits_loss(pred.astype(jnp.bfloat16), gt.astype(jnp.bfloat16)))
    assert bool(jnp.isfinite(loss_bf16))

    print("KERNEL_OK")
</pallas_src>

<mosaic_0001>
module attributes {stable_mosaic.version = 11 : i64} {
  func.func @_bce_kernel(%arg0: i32, %arg1: i32, %arg2: memref<2x128xf32, #tpu.memory_space<vmem>>, %arg3: memref<2x128xf32, #tpu.memory_space<vmem>>, %arg4: memref<1x8x128xf32, #tpu.memory_space<vmem>>, %arg5: memref<2x128xf32, #tpu.memory_space<vmem>>) attributes {dimension_semantics = [#tpu.dimension_semantics<parallel>, #tpu.dimension_semantics<arbitrary>], iteration_bounds = array<i64: 2, 1>, scalar_prefetch = 0 : i64, scratch_operands = 1 : i64, tpu.core_type = #tpu.core_type<tc>, window_params = [{transform_indices = @transform_0, window_bounds = array<i64: 2, 128>}, {transform_indices = @transform_1, window_bounds = array<i64: 2, 128>}, {transform_indices = @transform_2, window_bounds = array<i64: 1, 8, 128>}]} {
    %c0_i32 = arith.constant 0 : i32
    %0 = arith.cmpi eq, %arg1, %c0_i32 : i32
    %1 = arith.extui %0 : i1 to i32
    %c0_i32_0 = arith.constant 0 : i32
    %2 = arith.cmpi ne, %1, %c0_i32_0 : i32
    scf.if %2 {
      %cst_11 = arith.constant 0.000000e+00 : f32
      %21 = vector.broadcast %cst_11 : f32 to vector<2x128xf32>
      %c0_12 = arith.constant 0 : index
      %c0_13 = arith.constant 0 : index
      %22 = vector.load %arg5[%c0_12, %c0_13] : memref<2x128xf32, #tpu.memory_space<vmem>>, vector<2x128xf32>
      tpu.vector_store %arg5[%c0_12, %c0_13], %21 {strides = array<i32>} : memref<2x128xf32, #tpu.memory_space<vmem>>, vector<2x128xf32>,
    } else {
    }
    %c0 = arith.constant 0 : index
    %c0_1 = arith.constant 0 : index
    %3 = vector.load %arg2[%c0, %c0_1] : memref<2x128xf32, #tpu.memory_space<vmem>>, vector<2x128xf32>
    %c0_2 = arith.constant 0 : index
    %c0_3 = arith.constant 0 : index
    %4 = vector.load %arg3[%c0_2, %c0_3] : memref<2x128xf32, #tpu.memory_space<vmem>>, vector<2x128xf32>
    %cst = arith.constant 0.000000e+00 : f32
    %5 = vector.broadcast %cst : f32 to vector<2x128xf32>
    %6 = arith.maximumf %3, %5 : vector<2x128xf32>
    %7 = arith.mulf %3, %4 : vector<2x128xf32>
    %8 = arith.subf %6, %7 : vector<2x128xf32>
    %9 = math.absf %3 : vector<2x128xf32>
    %cst_4 = arith.constant 0.000000e+00 : f32
    %10 = vector.broadcast %cst_4 : f32 to vector<2x128xf32>
    %11 = arith.subf %10, %9 : vector<2x128xf32>
    %12 = math.exp %11 : vector<2x128xf32>
    %13 = math.log1p %12 : vector<2x128xf32>
    %14 = arith.addf %8, %13 : vector<2x128xf32>
    %c0_5 = arith.constant 0 : index
    %c0_6 = arith.constant 0 : index
    %15 = vector.load %arg5[%c0_5, %c0_6] : memref<2x128xf32, #tpu.memory_space<vmem>>, vector<2x128xf32>
    %16 = arith.addf %15, %14 : vector<2x128xf32>
    %c0_7 = arith.constant 0 : index
    %c0_8 = arith.constant 0 : index
    %17 = vector.load %arg5[%c0_7, %c0_8] : memref<2x128xf32, #tpu.memory_space<vmem>>, vector<2x128xf32>
    tpu.vector_store %arg5[%c0_7, %c0_8], %16 {strides = array<i32>} : memref<2x128xf32, #tpu.memory_space<vmem>>, vector<2x128xf32>,
    %c0_i32_9 = arith.constant 0 : i32
    %18 = arith.cmpi eq, %arg1, %c0_i32_9 : i32
    %19 = arith.extui %18 : i1 to i32
    %c0_i32_10 = arith.constant 0 : i32
    %20 = arith.cmpi ne, %19, %c0_i32_10 : i32
    scf.if %20 {
      %c0_11 = arith.constant 0 : index
      %c0_12 = arith.constant 0 : index
      %21 = vector.load %arg5[%c0_11, %c0_12] : memref<2x128xf32, #tpu.memory_space<vmem>>, vector<2x128xf32>
      %22 = vector.shape_cast %21 : vector<2x128xf32> to vector<1x2x128xf32>
      %cst_13 = arith.constant dense<0.000000e+00> : vector<1xf32>
      %23 = vector.multi_reduction <add>, %22, %cst_13 [1, 2] : vector<1x2x128xf32> to vector<1xf32>
      %24 = vector.shape_cast %23 : vector<1xf32> to vector<1x1x1xf32>
      %25 = vector.extract %24[0, 0, 0] : f32 from vector<1x1x1xf32>
      %26 = vector.broadcast %25 : f32 to vector<1x8x128xf32>
      %c0_14 = arith.constant 0 : index
      %c0_15 = arith.constant 0 : index
      %c0_16 = arith.constant 0 : index
      %27 = vector.load %arg4[%c0_14, %c0_15, %c0_16] : memref<1x8x128xf32, #tpu.memory_space<vmem>>, vector<1x8x128xf32>
      tpu.vector_store %arg4[%c0_14, %c0_15, %c0_16], %26 {strides = array<i32>} : memref<1x8x128xf32, #tpu.memory_space<vmem>>, vector<1x8x128xf32>,
    } else {
    }
    return
  }
  func.func @transform_0(%arg0: i32, %arg1: i32) -> (i32, i32) {
    %c0_i32 = arith.constant 0 : i32
    return %arg1, %arg0 : i32, i32
  }
  func.func @transform_1(%arg0: i32, %arg1: i32) -> (i32, i32) {
    %c0_i32 = arith.constant 0 : i32
    return %arg1, %arg0 : i32, i32
  }
  func.func @transform_2(%arg0: i32, %arg1: i32) -> (i32, i32, i32) {
    %c0_i32 = arith.constant 0 : i32
    %c0_i32_0 = arith.constant 0 : i32
    %c0_i32_1 = arith.constant 0 : i32
    return %arg0, %c0_i32, %c0_i32_0 : i32, i32, i32
  }
}

</mosaic_0001>

<llo_original>
// kernel: tpu_custom_call.1
$region0: #{tpu_custom_call.1}
  #allocation0 [shape = 'u32[]', space=smem, size = 0x4, offset = 0x4, fixed_abs, tag = 'smem constant byte address 0x4 - core index']
  #allocation1 [shape = 'u32[144,128]{1,0:T(1,128)}', space=vmem, size = 0x12000, scoped, tag = 'internal scratch']
  #allocation2 [shape = 'f32[2,128]{1,0:T(2,128)}', space=vmem, size = 0x400, scoped, tag = 'scratch operand']
  %s0 = inlined_call_operand.hbm [shape: f32[2,1024], index: 0, kind: input, shape index: {}]
  %s1 = inlined_call_operand.hbm [shape: f32[2,256], index: 1, kind: input, shape index: {}]
  %s2 = inlined_call_operand.hbm [shape: f32[2,8,128], index: 2, kind: output, shape index: {}]
  %s3 = sld [smem:[#allocation0]]
  $region57: #{tpu_custom_call.1} parent=0
    _
  %s5 = ssub.s32 1, %s3
  %s6 = scalar_select 0, %s5, %s3
  $region1: #{tpu_custom_call.1} parent=0
    #allocation3 [shape = 'u8[2048]{0}', space=vmem, size = 0x800, scoped, tag = 'input window, operand 0']
    #allocation4 [shape = 's32[2]{0}', space=sflag, size = 0x8, scoped, tag = 'scoped memory for tpu_custom_call.1']
    #allocation5 [shape = 's32[2]{0}', space=sflag, size = 0x8, scoped, tag = 'scoped memory for tpu_custom_call.1']
    #allocation6 [shape = 'u8[2048]{0}', space=vmem, size = 0x800, scoped, tag = 'input window, operand 1']
    #allocation7 [shape = 's32[2]{0}', space=sflag, size = 0x8, scoped, tag = 'scoped memory for tpu_custom_call.1']
    #allocation8 [shape = 'u8[8192]{0}', space=vmem, size = 0x2000, scoped, tag = 'output window, operand 0']
    %7 = vsyncpa [#allocation4], 0
    %s8 = scalar_lea.sflag [#allocation4], 1
    %9 = vsyncpa %s8, 0
    %10 = vsyncpa [#allocation7], 0
    %s11 = scalar_lea.sflag [#allocation7], 1
    %12 = vsyncpa %s11, 0
    %13 = vsyncpa [#allocation5], 0
    %s14 = scalar_lea.sflag [#allocation5], 1
    %15 = vsyncpa %s14, 0
    loop: start=0, step=1, limit=4
    $region2: #{tpu_custom_call.1} parent=1 // loop_pre_header
      _
    $region3: #{tpu_custom_call.1} parent=1 // loop_header
      %s17 = sphi 0, %s21
      %p18 = scmp.ge.s32.totalorder %s17, 4
      %s24 = sphi 0, %s36
      %s25 = sphi 0, %s32
      %s26 = sphi 0, %s24
      %s27 = sphi 0, %s25
      %s28 = sphi 0, %s26
      %s29 = sphi 0, %s27
      %s41 = sphi 0, %s43
      %s44 = sphi 0, %s41
      %s45 = sphi 0, %s44
      %s61 = sphi 0, %s45
      %s69 = sphi 0, %s71
      %s72 = sphi 0, %s69
      %s73 = sphi 0, %s72
      %s89 = sphi 0, %s73
      %s95 = sphi 0, %s97
      %s98 = sphi 0, %s95
      %s99 = sphi 0, %s98
      %s115 = sphi 0, %s99
    $region4: #{tpu_custom_call.1} parent=1 // loop_header_branch
      %20 = sbr.rel (%p18) target = $region8
    $region5: #{tpu_custom_call.1} parent=1 // loop_body
      %s22 = ssub.s32 %s17, 1
      %s23 = ssub.s32 %s17, 2
      %s30 = sadd.s32 1, %s25
      %p31 = scmp.ge.s32.totalorder %s30, 1
      %s32 = scalar_select %p31, 0, %s30
      %s33 = sadd.s32 1, %s24
      %s34 = scalar_select %p31, %s33, %s24
      %p35 = scmp.ge.s32.totalorder %s34, 2
      %s36 = scalar_select %p35, 0, %s34
      %s37 = ssub.s32 %s25, %s32
      %s38 = ssub.s32 %s24, %s36
      %s39 = sor.u32 %s37, %s38
      %p40 = scmp.eq.s32.totalorder %s39, 0
      %s42 = sadd.s32 %s41, 1
      %s43 = scalar_select %p40, %s41, %s42
      %p46 = pneg %p40
      %p47 = scmp.eq.s32.totalorder %s17, 1
      %p48 = por %p46, %p47
      %p49 = scmp.ne.s32.totalorder %s41, %s44
      %p50 = scmp.eq.s32.totalorder %s17, 0
      %p51 = por %p49, %p50
      %p52 = scmp.ne.s32.totalorder %s41, %s44
      %p53 = scmp.eq.s32.totalorder %s22, 1
      %p54 = por %p52, %p53
      %p55 = scmp.ne.s32.totalorder %s44, %s45
      %p56 = scmp.eq.s32.totalorder %s22, 0
      %p57 = por %p55, %p56
      %p58 = scmp.ne.s32.totalorder %s44, %s45
      %p59 = scmp.eq.s32.totalorder %s23, 1
      %p60 = por %p58, %p59
      %p62 = scmp.ne.s32.totalorder %s45, %s61
      %p63 = scmp.eq.s32.totalorder %s23, 0
      %p64 = por %p62, %p63
      %s65 = ssub.s32 %s25, %s32
      %s66 = ssub.s32 %s24, %s36
      %s67 = sor.u32 %s65, %s66
      %p68 = scmp.eq.s32.totalorder %s67, 0
      %s70 = sadd.s32 %s69, 1
      %s71 = scalar_select %p68, %s69, %s70
      %p74 = pneg %p68
      %p75 = scmp.eq.s32.totalorder %s17, 1
      %p76 = por %p74, %p75
      %p77 = scmp.ne.s32.totalorder %s69, %s72
      %p78 = scmp.eq.s32.totalorder %s17, 0
      %p79 = por %p77, %p78
      %p80 = scmp.ne.s32.totalorder %s69, %s72
      %p81 = scmp.eq.s32.totalorder %s22, 1
      %p82 = por %p80, %p81
      %p83 = scmp.ne.s32.totalorder %s72, %s73
      %p84 = scmp.eq.s32.totalorder %s22, 0
      %p85 = por %p83, %p84
      %p86 = scmp.ne.s32.totalorder %s72, %s73
      %p87 = scmp.eq.s32.totalorder %s23, 1
      %p88 = por %p86, %p87
      %p90 = scmp.ne.s32.totalorder %s73, %s89
      %p91 = scmp.eq.s32.totalorder %s23, 0
      %p92 = por %p90, %p91
      %s93 = ssub.s32 %s24, %s36
      %p94 = scmp.eq.s32.totalorder %s93, 0
      %s96 = sadd.s32 %s95, 1
      %s97 = scalar_select %p94, %s95, %s96
      %p100 = pneg %p94
      %p101 = scmp.eq.s32.totalorder %s17, 1
      %p102 = por %p100, %p101
      %p103 = scmp.ne.s32.totalorder %s95, %s98
      %p104 = scmp.eq.s32.totalorder %s17, 0
      %p105 = por %p103, %p104
      %p106 = scmp.ne.s32.totalorder %s95, %s98
      %p107 = scmp.eq.s32.totalorder %s22, 1
      %p108 = por %p106, %p107
      %p109 = scmp.ne.s32.totalorder %s98, %s99
      %p110 = scmp.eq.s32.totalorder %s22, 0
      %p111 = por %p109, %p110
      %p112 = scmp.ne.s32.totalorder %s98, %s99
      %p113 = scmp.eq.s32.totalorder %s23, 1
      %p114 = por %p112, %p113
      %p116 = scmp.ne.s32.totalorder %s99, %s115
      %p117 = scmp.eq.s32.totalorder %s23, 0
      %p118 = por %p116, %p117
      %p119 = scmp.le.s32.totalorder 1, %s17
      %p120 = scmp.lt.s32.totalorder %s17, 3
      %p121 = pnand %p119, %p120
      %p122 = pneg %p121
      // Predicated region
      $region9: #{tpu_custom_call.1} parent=5 // pred_check
        _
      $region10: #{tpu_custom_call.1} parent=5 // pred_check_branch
        %124 = sbr.rel (%p121) target = $region12
      $region11: #{tpu_custom_call.1} parent=5 // pred_region
        %s125 = ssub.s32 %s17, 1
      $region12: #{tpu_custom_call.1} parent=5 // pred_fallthru
        _
      %p126 = scmp.lt.s32.totalorder %s17, 2
      // Predicated region
      $region13: #{tpu_custom_call.1} parent=5 // pred_check
        %p127 = pneg %p126
      $region14: #{tpu_custom_call.1} parent=5 // pred_check_branch
        %129 = sbr.rel (%p127) target = $region16
      $region15: #{tpu_custom_call.1} parent=5 // pred_region
        // Predicated region
        $region17: #{tpu_custom_call.1} parent=15 // pred_check
          %p130 = pneg %p51
        $region18: #{tpu_custom_call.1} parent=15 // pred_check_branch
          %132 = sbr.rel (%p130) target = $region20
        $region19: #{tpu_custom_call.1} parent=15 // pred_region
          %s133 = sand.u32 %s41, 1
          %s134 = scalar_lea.sflag [#allocation4], %s133
          %s135 = sand.u32 %s41, 1
          %s136 = smul.addr %s135, 2
          %s137 = scalar_lea.vmem [#allocation3], %s136
          %s139 = ssub.s32 32, 32
          %140 = vsyncadd %s134, %s139
          %s141 = smul.addr %s25, 8
          %s142 = sadd.s32 %s24, %s141
          %s143 = smul.addr %s142, 32
          %s144 = scalar_lea.hbm %s0, %s143
          %s146 = sshll.u32 %s137, 4
          %s147 = int_to_ptr.vmem [resolvable:$true] %s146
          %149 = dma.hbm_to_vmem [thread:$0]  %s144, 32, %s147, %s134
        $region20: #{tpu_custom_call.1} parent=15 // pred_fallthru
          _
        // Predicated region
        $region21: #{tpu_custom_call.1} parent=15 // pred_check
          %p150 = pneg %p79
        $region22: #{tpu_custom_call.1} parent=15 // pred_check_branch
          %152 = sbr.rel (%p150) target = $region24
        $region23: #{tpu_custom_call.1} parent=15 // pred_region
          %s153 = sand.u32 %s69, 1
          %s154 = scalar_lea.sflag [#allocation7], %s153
          %s155 = sand.u32 %s69, 1
          %s156 = smul.addr %s155, 2
          %s157 = scalar_lea.vmem [#allocation6], %s156
          %s159 = ssub.s32 32, 32
          %160 = vsyncadd %s154, %s159
          %s161 = smul.addr %s25, 2
          %s162 = sadd.s32 %s24, %s161
          %s163 = smul.addr %s162, 32
          %s164 = scalar_lea.hbm %s1, %s163
          %s166 = sshll.u32 %s157, 4
          %s167 = int_to_ptr.vmem [resolvable:$true] %s166
          %169 = dma.hbm_to_vmem [thread:$0]  %s164, 32, %s167, %s154
        $region24: #{tpu_custom_call.1} parent=15 // pred_fallthru
          _
      $region16: #{tpu_custom_call.1} parent=5 // pred_fallthru
        _
      %p170 = scmp.le.s32.totalorder 1, %s17
      %p171 = scmp.lt.s32.totalorder %s17, 3
      %p172 = pnand %p170, %p171
      %p173 = pneg %p172
      // Predicated region
      $region25: #{tpu_custom_call.1} parent=5 // pred_check
        _
      $region26: #{tpu_custom_call.1} parent=5 // pred_check_branch
        %175 = sbr.rel (%p172) target = $region28
      $region27: #{tpu_custom_call.1} parent=5 // pred_region
        %s176 = ssub.s32 %s17, 1
        %s177 = sand.u32 %s44, 1
        %s178 = scalar_lea.sflag [#allocation4], %s177
        %s179 = sand.u32 %s44, 1
        %s180 = smul.addr %s179, 2
        %s181 = scalar_lea.vmem [#allocation3], %s180
        // Predicated region
        $region29: #{tpu_custom_call.1} parent=27 // pred_check
          %p182 = pneg %p57
        $region30: #{tpu_custom_call.1} parent=27 // pred_check_branch
          %184 = sbr.rel (%p182) target = $region32
        $region31: #{tpu_custom_call.1} parent=27 // pred_region
          %185 = dma.done %s178, 32
        $region32: #{tpu_custom_call.1} parent=27 // pred_fallthru
          _
        %s186 = sand.u32 %s72, 1
        %s187 = scalar_lea.sflag [#allocation7], %s186
        %s188 = sand.u32 %s72, 1
        %s189 = smul.addr %s188, 2
        %s190 = scalar_lea.vmem [#allocation6], %s189
        // Predicated region
        $region33: #{tpu_custom_call.1} parent=27 // pred_check
          %p191 = pneg %p85
        $region34: #{tpu_custom_call.1} parent=27 // pred_check_branch
          %193 = sbr.rel (%p191) target = $region36
        $region35: #{tpu_custom_call.1} parent=27 // pred_region
          %194 = dma.done %s187, 32
        $region36: #{tpu_custom_call.1} parent=27 // pred_fallthru
          _
        %s195 = sand.u32 %s44, 1
        %s196 = scalar_lea.sflag [#allocation4], %s195
        %s197 = sand.u32 %s44, 1
        %s198 = smul.addr %s197, 2
        %s199 = scalar_lea.vmem [#allocation3], %s198
        %p200 = pneg %p57
        %p201 = pneg %p54
        %s202 = sand.u32 %s72, 1
        %s203 = scalar_lea.sflag [#allocation7], %s202
        %s204 = sand.u32 %s72, 1
        %s205 = smul.addr %s204, 2
        %s206 = scalar_lea.vmem [#allocation6], %s205
        %p207 = pneg %p85
        %p208 = pneg %p82
        %p209 = pneg %p111
        %p210 = pneg %p108
        %s211 = sand.u32 %s98, 1
        %s212 = scalar_lea.sflag [#allocation5], %s211
        %s213 = sand.u32 %s98, 1
        %s214 = smul.addr %s213, 8
        %s215 = scalar_lea.vmem [#allocation8], %s214
        %p216 = scmp.eq.s32.totalorder %s27, 0
        // Predicated region
        $region37: #{tpu_custom_call.1} parent=27 // pred_check
          %p217 = pneg %p216
        $region38: #{tpu_custom_call.1} parent=27 // pred_check_branch
          %219 = sbr.rel (%p217) target = $region40
        $region39: #{tpu_custom_call.1} parent=27 // pred_region
          %220 = vst [vmem:[#allocation2] sm:$0x3] 0.0
        $region40: #{tpu_custom_call.1} parent=27 // pred_fallthru
          _
        %v221 = vld [vmem:[%s181] sm:$0x3]
        %v222 = vld [vmem:[%s190] sm:$0x3]
        %v223 = vmax.f32 %v221, 0.0
        %v224 = vmul.f32 %v221, %v222
        %v225 = vsub.f32 %v223, %v224
        %v226 = vand.u32 2147483647, %v221
        %v227 = vsub.f32 0.0, %v226
        %v228 = vmul.f32 %v227, 1.442695
        %v229 = vpow.pop %v228
        %v230 = vadd.f32 %v229, 1.0
        %v231 = vlog2.pop %v230
        %v232 = vmul.f32 %v231, 0.6931472
        %v233 = vmul.f32 -0.5, %v229
        %v234 = vadd.f32 %v233, 1.0
        %v235 = vmul.f32 %v234, %v229
        %v236 = vand.u32 2147483647, %v229
        %vm237 = vcmp.lt.f32.partialorder %v236, 0.0004427343
        %v238 = vsel %vm237, %v235, %v232
        %v239 = vadd.f32 %v225, %v238
        %v240 = vld [vmem:[#allocation2] sm:$0x3]
        %v241 = vadd.f32 %v240, %v239
        %242 = vst [vmem:[#allocation2] sm:$0x3] %v241
        // Predicated region
        $region41: #{tpu_custom_call.1} parent=27 // pred_check
          %p243 = pneg %p216
        $region42: #{tpu_custom_call.1} parent=27 // pred_check_branch
          %245 = sbr.rel (%p243) target = $region44
        $region43: #{tpu_custom_call.1} parent=27 // pred_region
          %v246 = vld [vmem:[#allocation2] sm:$0x3]
          %vm247 = vcmask 1041408
          %v248 = vsel %vm247, %v246, 0.0
          %249 = vadd.xlane.f32.xlu0 %v248
          %v250 = vpop.xlane.xlu0 %249
          %v251 = vrot.slane %v250, 4
          %v252 = vadd.f32 %v250, %v251
          %v253 = vrot.slane %v252, 2
          %v254 = vadd.f32 %v252, %v253
          %v255 = vrot.slane %v254, 1
          %v256 = vadd.f32 %v254, %v255
          %s257 = vtos %v256
          %v258 = vstv %s257
          %259 = vst [vmem:[%s215] sm:$0xff] %v258
        $region44: #{tpu_custom_call.1} parent=27 // pred_fallthru
          _
        %s260 = sand.u32 %s98, 1
        %s261 = scalar_lea.sflag [#allocation5], %s260
        %s262 = sand.u32 %s98, 1
        %s263 = smul.addr %s262, 8
        %s264 = scalar_lea.vmem [#allocation8], %s263
        // Predicated region
        $region45: #{tpu_custom_call.1} parent=27 // pred_check
          %p265 = pneg %p108
        $region46: #{tpu_custom_call.1} parent=27 // pred_check_branch
          %267 = sbr.rel (%p265) target = $region48
        $region47: #{tpu_custom_call.1} parent=27 // pred_region
          %s269 = ssub.s32 128, 128
          %270 = vsyncadd %s261, %s269
          %s271 = smul.addr %s26, 128
          %s272 = scalar_lea.hbm %s2, %s271
          %s274 = sshll.u32 %s264, 4
          %s275 = int_to_ptr.vmem [resolvable:$true] %s274
          %277 = dma.vmem_to_hbm [thread:$0]  %s275, 128, %s272, %s261
        $region48: #{tpu_custom_call.1} parent=27 // pred_fallthru
          _
      $region28: #{tpu_custom_call.1} parent=5 // pred_fallthru
        _
      %p278 = scmp.le.s32.totalorder 2, %s17
      // Predicated region
      $region49: #{tpu_custom_call.1} parent=5 // pred_check
        %p279 = pneg %p278
      $region50: #{tpu_custom_call.1} parent=5 // pred_check_branch
        %281 = sbr.rel (%p279) target = $region52
      $region51: #{tpu_custom_call.1} parent=5 // pred_region
        %s282 = ssub.s32 %s17, 2
        // Predicated region
        $region53: #{tpu_custom_call.1} parent=51 // pred_check
          %p283 = pneg %p114
        $region54: #{tpu_custom_call.1} parent=51 // pred_check_branch
          %285 = sbr.rel (%p283) target = $region56
        $region55: #{tpu_custom_call.1} parent=51 // pred_region
          %s286 = sand.u32 %s99, 1
          %s287 = scalar_lea.sflag [#allocation5], %s286
          %s288 = sand.u32 %s99, 1
          %s289 = smul.addr %s288, 8
          %s290 = scalar_lea.vmem [#allocation8], %s289
          %291 = dma.done %s287, 128
        $region56: #{tpu_custom_call.1} parent=51 // pred_fallthru
          _
      $region52: #{tpu_custom_call.1} parent=5 // pred_fallthru
        _
    $region6: #{tpu_custom_call.1} parent=1 // loop_footer
      %s21 = sadd.s32 1, %s17
    $region7: #{tpu_custom_call.1} parent=1 // loop_footer_branch
      %16 = sbr.rel target = $region3
    $region8: #{tpu_custom_call.1} parent=1 // loop_exit
      _
    %292 = vsyncpa [#allocation4], 1
    %s293 = scalar_lea.sflag [#allocation4], 1
    %294 = vsyncpa %s293, 1
    %295 = vsyncpa [#allocation7], 1
    %s296 = scalar_lea.sflag [#allocation7], 1
    %297 = vsyncpa %s296, 1
    %298 = vsyncpa [#allocation5], 1
    %s299 = scalar_lea.sflag [#allocation5], 1
    %300 = vsyncpa %s299, 1

</llo_original>
